<compile_context>
chip_gen: v7x
topology: tpu7x:2x2x1
jax: 0.10.0
libtpu: 0.0.40
codegen_flags: <defaults>
</compile_context>

<pallas_src>
import functools

import jax
import jax.numpy as jnp
from jax import lax
from jax.experimental import pallas as pl
from jax.experimental.pallas import tpu as pltpu


def _make_kernel(inv_scale):
    """qk + bias -> query-axis softmax -> attn @ v for one batch block."""

    def _attn_kernel(q_ref, k_ref, v_ref, a_ref, out_ref):
        f32 = jnp.float32
        a = a_ref[...]                                     # (Lq, Lk)

        if len(q_ref.shape) == 2:
            # block_b == 1 (leading dim squeezed): plain 2-D MXU matmuls.
            q = q_ref[...] * f32(inv_scale)                # (Lq, D)
            s = lax.dot_general(                           # q @ k^T  (Lq, Lk)
                q, k_ref[...],
                dimension_numbers=(((1,), (1,)), ((), ())),
                preferred_element_type=f32,
            ) + a
            m = jnp.max(s, axis=0, keepdims=True)          # (1, Lk)
            e = jnp.exp(s - m)                             # (Lq, Lk)
            inv = pl.reciprocal(jnp.sum(e, axis=0, keepdims=True), approx=False)
            attn = e * inv                                 # (Lq, Lk)
            out_ref[...] = jnp.dot(
                attn, v_ref[...], preferred_element_type=f32
            ).astype(out_ref.dtype)                        # (Lq, Dv)
        else:
            q = q_ref[...] * f32(inv_scale)                # (Bt, Lq, D)
            s = lax.dot_general(                           # q @ k^T  (Bt, Lq, Lk)
                q, k_ref[...],
                dimension_numbers=(((2,), (2,)), ((0,), (0,))),
                preferred_element_type=f32,
            ) + a[None]
            # Numerically stable softmax over the query axis (dim=-2).
            m = jnp.max(s, axis=1, keepdims=True)          # (Bt, 1, Lk)
            e = jnp.exp(s - m)                             # (Bt, Lq, Lk)
            inv = pl.reciprocal(jnp.sum(e, axis=1, keepdims=True), approx=False)
            attn = e * inv                                 # (Bt, Lq, Lk)
            out_ref[...] = lax.dot_general(                # attn @ v (Bt, Lq, Dv)
                attn, v_ref[...],
                dimension_numbers=(((2,), (1,)), ((0,), (0,))),
                preferred_element_type=f32,
            ).astype(out_ref.dtype)

    return _attn_kernel


def _pick_block_b(B, Lq, Lk, D, Dv, budget_bytes=24 * 1024 * 1024):
    """Largest divisor of B whose per-step footprint fits the VMEM budget.

    For small problems this gives block_b == B, i.e. a single grid step
    (minimal per-step pipeline overhead on the 1-TC chips v5e/v6e).
    """
    def footprint(bb):
        # double-buffered input/output streams + the broadcast bias tile
        io = 2 * 4 * (bb * (Lq * D + Lk * D + Lk * Dv + Lq * Dv) + Lq * Lk)
        # a few live f32 (bb, Lq, Lk) intermediates (s, e, attn)
        live = 4 * 4 * bb * Lq * Lk
        return io + live

    for bb in range(B, 0, -1):
        if B % bb == 0 and footprint(bb) <= budget_bytes:
            return bb
    return 1


@functools.partial(jax.jit, static_argnames=("block_b",))
def attention_forward(q, k, v, a, *, block_b=None):
    B, Lq, D = q.shape
    _, Lk, _ = k.shape
    Dv = v.shape[-1]

    if block_b is None:
        block_b = _pick_block_b(B, Lq, Lk, D, Dv)
    assert B % block_b == 0
    grid_b = B // block_b

    inv_scale = 1.0 / float(D) ** 0.5        # fold 1/sqrt(k.size(-1)) into q

    if block_b == 1:
        qb = (pl.Squeezed(), Lq, D)
        kb = (pl.Squeezed(), Lk, D)
        vb = (pl.Squeezed(), Lk, Dv)
        ob = (pl.Squeezed(), Lq, Dv)
    else:
        qb = (block_b, Lq, D)
        kb = (block_b, Lk, D)
        vb = (block_b, Lk, Dv)
        ob = (block_b, Lq, Dv)

    grid_spec = pltpu.PrefetchScalarGridSpec(
        num_scalar_prefetch=0,
        grid=(grid_b,),
        in_specs=[
            pl.BlockSpec(qb, lambda b: (b, 0, 0)),
            pl.BlockSpec(kb, lambda b: (b, 0, 0)),
            pl.BlockSpec(vb, lambda b: (b, 0, 0)),
            pl.BlockSpec((Lq, Lk), lambda b: (0, 0)),
        ],
        out_specs=pl.BlockSpec(ob, lambda b: (b, 0, 0)),
    )

    out = pl.pallas_call(
        _make_kernel(inv_scale),
        out_shape=jax.ShapeDtypeStruct((B, Lq, Dv), jnp.float32),
        grid_spec=grid_spec,
        compiler_params=pltpu.CompilerParams(
            dimension_semantics=("parallel",),      # no carried state
            vmem_limit_bytes=32 * 1024 * 1024,      # valid on every generation
        ),
    )(q, k, v, a)

    # Softmax is over the query axis, so every (b, :, k) column of attn sums to
    # exactly 1 analytically -> attn.sum() == B * Lk (per perf review the
    # in-kernel reduce + SMEM side-output is dropped).
    # TODO(synk): if Lq is ever padded/masked this identity breaks -- restore a
    # masked in-kernel reduce in that case.
    attn_sum = jnp.float32(B * Lk)

    return out, attn_sum


def _reference(q, k, v, a):
    scale = jnp.sqrt(jnp.float32(k.shape[-1]))
    qk = jnp.einsum("bqd,bkd->bqk", q, k) / scale + a[None]
    attn = jax.nn.softmax(qk, axis=-2)
    out = jnp.einsum("bqk,bkv->bqv", attn, v)
    return out, jnp.sum(attn)


if __name__ == "__main__":
    key = jax.random.PRNGKey(0)
    kq, kk, kv, ka = jax.random.split(key, 4)

    B, Lq, Lk, D, Dv = 2, 8, 16, 32, 16
    q = jax.random.normal(kq, (B, Lq, D), dtype=jnp.float32)
    k = jax.random.normal(kk, (B, Lk, D), dtype=jnp.float32)
    v = jax.random.normal(kv, (B, Lk, Dv), dtype=jnp.float32)
    a = jax.random.normal(ka, (Lq, Lk), dtype=jnp.float32)

    out, attn_sum = attention_forward(q, k, v, a)
    jax.block_until_ready((out, attn_sum))

    ref_out, ref_sum = _reference(q, k, v, a)
    assert jnp.allclose(out, ref_out, atol=1e-5, rtol=1e-5), "output mismatch"
    assert jnp.allclose(attn_sum, ref_sum, atol=1e-4, rtol=1e-5), "sum mismatch"

    print("KERNEL_OK")
</pallas_src>

<mosaic_0001>
module attributes {stable_mosaic.version = 11 : i64} {
  func.func @_attn_kernel(%arg0: i32, %arg1: memref<2x8x32xf32, #tpu.memory_space<vmem>>, %arg2: memref<2x16x32xf32, #tpu.memory_space<vmem>>, %arg3: memref<2x16x16xf32, #tpu.memory_space<vmem>>, %arg4: memref<8x16xf32, #tpu.memory_space<vmem>>, %arg5: memref<2x8x16xf32, #tpu.memory_space<vmem>>) attributes {dimension_semantics = [#tpu.dimension_semantics<parallel>], iteration_bounds = array<i64: 1>, scalar_prefetch = 0 : i64, scratch_operands = 0 : i64, tpu.core_type = #tpu.core_type<tc>, window_params = [{transform_indices = @transform_0, window_bounds = array<i64: 2, 8, 32>}, {transform_indices = @transform_1, window_bounds = array<i64: 2, 16, 32>}, {transform_indices = @transform_2, window_bounds = array<i64: 2, 16, 16>}, {pipeline_mode = #tpu.pipeline_mode<synchronous>, transform_indices = @transform_3, window_bounds = array<i64: 8, 16>}, {transform_indices = @transform_4, window_bounds = array<i64: 2, 8, 16>}]} {
    %c0 = arith.constant 0 : index
    %c0_0 = arith.constant 0 : index
    %0 = vector.load %arg4[%c0, %c0_0] : memref<8x16xf32, #tpu.memory_space<vmem>>, vector<8x16xf32>
    %c0_1 = arith.constant 0 : index
    %c0_2 = arith.constant 0 : index
    %c0_3 = arith.constant 0 : index
    %1 = vector.load %arg1[%c0_1, %c0_2, %c0_3] : memref<2x8x32xf32, #tpu.memory_space<vmem>>, vector<2x8x32xf32>
    %cst = arith.constant 0.176776692 : f32
    %2 = vector.broadcast %cst : f32 to vector<2x8x32xf32>
    %3 = arith.mulf %1, %2 : vector<2x8x32xf32>
    %c0_4 = arith.constant 0 : index
    %c0_5 = arith.constant 0 : index
    %c0_6 = arith.constant 0 : index
    %4 = vector.load %arg2[%c0_4, %c0_5, %c0_6] : memref<2x16x32xf32, #tpu.memory_space<vmem>>, vector<2x16x32xf32>
    %cst_7 = arith.constant dense<0.000000e+00> : vector<2x8x16xf32>
    %5 = tpu.matmul %3, %4, %cst_7 {dimension_numbers = #tpu.dot_dimension_numbers<[2], [2], [1], [1], [0, 0, 0, 1, 1, 1], [0], [0]>} : vector<2x8x32xf32>, vector<2x16x32xf32>, vector<2x8x16xf32> -> vector<2x8x16xf32>
    %6 = vector.shape_cast %0 : vector<8x16xf32> to vector<1x8x16xf32>
    %7 = vector.broadcast %6 : vector<1x8x16xf32> to vector<2x8x16xf32>
    %8 = arith.addf %5, %7 : vector<2x8x16xf32>
    %cst_8 = arith.constant dense<0xFF800000> : vector<2x16xf32>
    %9 = vector.multi_reduction <maximumf>, %8, %cst_8 [1] : vector<2x8x16xf32> to vector<2x16xf32>
    %10 = vector.shape_cast %9 : vector<2x16xf32> to vector<2x1x16xf32>
    %11 = vector.broadcast %10 : vector<2x1x16xf32> to vector<2x8x16xf32>
    %12 = arith.subf %8, %11 : vector<2x8x16xf32>
    %13 = math.exp %12 : vector<2x8x16xf32>
    %cst_9 = arith.constant dense<0.000000e+00> : vector<2x16xf32>
    %14 = vector.multi_reduction <add>, %13, %cst_9 [1] : vector<2x8x16xf32> to vector<2x16xf32>
    %15 = vector.shape_cast %14 : vector<2x16xf32> to vector<2x1x16xf32>
    %16 = tpu.reciprocal %15 : vector<2x1x16xf32> -> vector<2x1x16xf32>
    %17 = vector.broadcast %16 : vector<2x1x16xf32> to vector<2x8x16xf32>
    %18 = arith.mulf %13, %17 : vector<2x8x16xf32>
    %c0_10 = arith.constant 0 : index
    %c0_11 = arith.constant 0 : index
    %c0_12 = arith.constant 0 : index
    %19 = vector.load %arg3[%c0_10, %c0_11, %c0_12] : memref<2x16x16xf32, #tpu.memory_space<vmem>>, vector<2x16x16xf32>
    %cst_13 = arith.constant dense<0.000000e+00> : vector<2x8x16xf32>
    %20 = tpu.matmul %18, %19, %cst_13 {dimension_numbers = #tpu.dot_dimension_numbers<[2], [1], [1], [2], [0, 0, 0, 1, 1, 2], [0], [0]>} : vector<2x8x16xf32>, vector<2x16x16xf32>, vector<2x8x16xf32> -> vector<2x8x16xf32>
    %c0_14 = arith.constant 0 : index
    %c0_15 = arith.constant 0 : index
    %c0_16 = arith.constant 0 : index
    %21 = vector.load %arg5[%c0_14, %c0_15, %c0_16] : memref<2x8x16xf32, #tpu.memory_space<vmem>>, vector<2x8x16xf32>
    tpu.vector_store %arg5[%c0_14, %c0_15, %c0_16], %20 {strides = array<i32>} : memref<2x8x16xf32, #tpu.memory_space<vmem>>, vector<2x8x16xf32>,
    return
  }
  func.func @transform_0(%arg0: i32) -> (i32, i32, i32) {
    %c0_i32 = arith.constant 0 : i32
    %c0_i32_0 = arith.constant 0 : i32
    %c0_i32_1 = arith.constant 0 : i32
    return %arg0, %c0_i32, %c0_i32_0 : i32, i32, i32
  }
  func.func @transform_1(%arg0: i32) -> (i32, i32, i32) {
    %c0_i32 = arith.constant 0 : i32
    %c0_i32_0 = arith.constant 0 : i32
    %c0_i32_1 = arith.constant 0 : i32
    return %arg0, %c0_i32, %c0_i32_0 : i32, i32, i32
  }
  func.func @transform_2(%arg0: i32) -> (i32, i32, i32) {
    %c0_i32 = arith.constant 0 : i32
    %c0_i32_0 = arith.constant 0 : i32
    %c0_i32_1 = arith.constant 0 : i32
    return %arg0, %c0_i32, %c0_i32_0 : i32, i32, i32
  }
  func.func @transform_3(%arg0: i32) -> (i32, i32) {
    %c0_i32 = arith.constant 0 : i32
    %c0_i32_0 = arith.constant 0 : i32
    %c0_i32_1 = arith.constant 0 : i32
    return %c0_i32, %c0_i32_0 : i32, i32
  }
  func.func @transform_4(%arg0: i32) -> (i32, i32, i32) {
    %c0_i32 = arith.constant 0 : i32
    %c0_i32_0 = arith.constant 0 : i32
    %c0_i32_1 = arith.constant 0 : i32
    return %arg0, %c0_i32, %c0_i32_0 : i32, i32, i32
  }
}

</mosaic_0001>

<llo_original>
// kernel: attention_forward.1
$region0: #{attention_forward.1}
  #allocation0 [shape = 'u32[]', space=smem, size = 0x4, offset = 0x4, fixed_abs, tag = 'smem constant byte address 0x4 - core index']
  #allocation1 [shape = 'u32[144,128]{1,0:T(1,128)}', space=vmem, size = 0x12000, scoped, tag = 'internal scratch']
  %s0 = inlined_call_operand.hbm [shape: f32[2,8,32], index: 0, kind: input, shape index: {}]
  %s1 = inlined_call_operand.hbm [shape: f32[2,16,32], index: 1, kind: input, shape index: {}]
  %s2 = inlined_call_operand.hbm [shape: f32[2,16,16], index: 2, kind: input, shape index: {}]
  %s3 = inlined_call_operand.vmem [shape: f32[8,16], index: 3, kind: input, shape index: {}]
  %s4 = inlined_call_operand.hbm [shape: f32[2,8,16], index: 4, kind: output, shape index: {}]
  %s5 = sld [smem:[#allocation0]]
  $region38: #{attention_forward.1} parent=0
    _
  %s7 = ssub.s32 1, %s5
  %s8 = scalar_select 0, %s7, %s5
  $region1: #{attention_forward.1} parent=0
    #allocation2 [shape = 'u8[8192]{0}', space=vmem, size = 0x2000, scoped, tag = 'input window, operand 0, single buffered']
    #allocation3 [shape = 's32[1]{0}', space=sflag, size = 0x4, scoped, tag = 'scoped memory for attention_forward.1']
    #allocation4 [shape = 's32[1]{0}', space=sflag, size = 0x4, scoped, tag = 'scoped memory for attention_forward.1']
    #allocation5 [shape = 'u8[16384]{0}', space=vmem, size = 0x4000, scoped, tag = 'input window, operand 1, single buffered']
    #allocation6 [shape = 's32[1]{0}', space=sflag, size = 0x4, scoped, tag = 'scoped memory for attention_forward.1']
    #allocation7 [shape = 'u8[16384]{0}', space=vmem, size = 0x4000, scoped, tag = 'input window, operand 2, single buffered']
    #allocation8 [shape = 'u8[8192]{0}', space=vmem, size = 0x2000, scoped, tag = 'output window, operand 0, single buffered']
    %9 = vsyncpa [#allocation3], 0
    %10 = vsyncpa [#allocation6], 0
    %11 = vsyncpa [#allocation4], 0
    // Predicated region
    $region2: #{attention_forward.1} parent=1 // pred_check
      _
    $region3: #{attention_forward.1} parent=1 // pred_check_branch
      %13 = sbr.rel (0) target = $region5
    $region4: #{attention_forward.1} parent=1 // pred_region
      %s15 = ssub.s32 256, 256
      %16 = vsyncadd [#allocation3], %s15
      %s17 = sshll.u32 [#allocation2], 4
      %s18 = int_to_ptr.vmem [resolvable:$true] %s17
      %23 = dma.hbm_to_vmem [thread:$0]  %s0, 256, %s18, [#allocation3], 128, 128, 8
    $region5: #{attention_forward.1} parent=1 // pred_fallthru
      _
    // Predicated region
    $region6: #{attention_forward.1} parent=1 // pred_check
      _
    $region7: #{attention_forward.1} parent=1 // pred_check_branch
      %25 = sbr.rel (0) target = $region9
    $region8: #{attention_forward.1} parent=1 // pred_region
      %s27 = ssub.s32 512, 512
      %28 = vsyncadd [#allocation6], %s27
      %s29 = sshll.u32 [#allocation5], 4
      %s30 = int_to_ptr.vmem [resolvable:$true] %s29
      %35 = dma.hbm_to_vmem [thread:$0]  %s1, 512, %s30, [#allocation6], 128, 128, 8
    $region9: #{attention_forward.1} parent=1 // pred_fallthru
      _
    // Predicated region
    $region10: #{attention_forward.1} parent=1 // pred_check
      _
    $region11: #{attention_forward.1} parent=1 // pred_check_branch
      %37 = sbr.rel (0) target = $region13
    $region12: #{attention_forward.1} parent=1 // pred_region
      %s39 = ssub.s32 512, 512
      %40 = vsyncadd [#allocation6], %s39
      %s41 = sshll.u32 [#allocation7], 4
      %s42 = int_to_ptr.vmem [resolvable:$true] %s41
      %47 = dma.hbm_to_vmem [thread:$0]  %s2, 512, %s42, [#allocation6], 128, 128, 8
    $region13: #{attention_forward.1} parent=1 // pred_fallthru
      _
    // Predicated region
    $region14: #{attention_forward.1} parent=1 // pred_check
      _
    $region15: #{attention_forward.1} parent=1 // pred_check_branch
      %49 = sbr.rel (0) target = $region17
    $region16: #{attention_forward.1} parent=1 // pred_region
      _
    $region17: #{attention_forward.1} parent=1 // pred_fallthru
      _
    // Predicated region
    $region18: #{attention_forward.1} parent=1 // pred_check
      _
    $region19: #{attention_forward.1} parent=1 // pred_check_branch
      %51 = sbr.rel (0) target = $region21
    $region20: #{attention_forward.1} parent=1 // pred_region
      %52 = dma.done [#allocation3], 256
    $region21: #{attention_forward.1} parent=1 // pred_fallthru
      _
    // Predicated region
    $region22: #{attention_forward.1} parent=1 // pred_check
      _
    $region23: #{attention_forward.1} parent=1 // pred_check_branch
      %54 = sbr.rel (0) target = $region25
    $region24: #{attention_forward.1} parent=1 // pred_region
      %55 = dma.done [#allocation6], 512
    $region25: #{attention_forward.1} parent=1 // pred_fallthru
      _
    // Predicated region
    $region26: #{attention_forward.1} parent=1 // pred_check
      _
    $region27: #{attention_forward.1} parent=1 // pred_check_branch
      %57 = sbr.rel (0) target = $region29
    $region28: #{attention_forward.1} parent=1 // pred_region
      %58 = dma.done [#allocation6], 512
    $region29: #{attention_forward.1} parent=1 // pred_fallthru
      _
    %v59 = vld [vmem:[%s3] sm:$0xff]
    %v60 = vld [vmem:[#allocation2] sm:$0xff]
    %v61 = vld [vmem:[#allocation2 + $0x8] sm:$0xff]
    %v62 = vmul.f32 %v60, 0.17677669
    %v63 = vmul.f32 %v61, 0.17677669
    %v64 = vld [vmem:[#allocation5] sm:$0xff]
    %v65 = vld [vmem:[#allocation5 + $0x8] sm:$0xff]
    %v66 = vld [vmem:[#allocation5 + $0x10] sm:$0xff]
    %v67 = vld [vmem:[#allocation5 + $0x18] sm:$0xff]
    %vm68 = vcmask 261120
    %v70 = vsel %vm68, %v62, 0
    %v73 = vsel %vm68, %v64, 0
    %v76 = vsel %vm68, %v65, 0
    %78 = vmatprep.subr.mxu0 0.0
    %79 = vmatpush1.xpose.msra.mxu0 %v73
    %80 = vmatprep.subr.mxu0 0.0
    %81 = vmatpush1.xpose.msra.mxu0 %v76
    %82 = vmatprep.subr.mxu0 0.0
    %83 = vmatpush1.xpose.msra.mxu0 0.0
    %84 = vmatprep.subr.mxu0 0.0
    %85 = vmatpush1.xpose.msra.mxu0 0.0
    %86 = vmatprep.subr.mxu0 0.0
    %87 = vmatpush1.xpose.msra.mxu0 0.0
    %88 = vmatprep.subr.mxu0 0.0
    %89 = vmatpush1.xpose.msra.mxu0 0.0
    %90 = vmatprep.subr.mxu0 0.0
    %91 = vmatpush1.xpose.msra.mxu0 0.0
    %92 = vmatprep.subr.mxu0 0.0
    %93 = vmatpush1.xpose.msra.mxu0 0.0
    %94 = vmatprep.subr.mxu0 0.0
    %95 = vmatpush1.xpose.msra.mxu0 0.0
    %96 = vmatprep.subr.mxu0 0.0
    %97 = vmatpush1.xpose.msra.mxu0 0.0
    %98 = vmatprep.subr.mxu0 0.0
    %99 = vmatpush1.xpose.msra.mxu0 0.0
    %100 = vmatprep.subr.mxu0 0.0
    %101 = vmatpush1.xpose.msra.mxu0 0.0
    %102 = vmatprep.subr.mxu0 0.0
    %103 = vmatpush1.xpose.msra.mxu0 0.0
    %104 = vmatprep.subr.mxu0 0.0
    %105 = vmatpush1.xpose.msra.mxu0 0.0
    %106 = vmatprep.subr.mxu0 0.0
    %107 = vmatpush1.xpose.msra.mxu0 0.0
    %108 = vmatprep.subr.mxu0 0.0
    %109 = vmatpush1.xpose.msra.mxu0 0.0
    %110 = vmatprep.subr.mxu0 0.0
    %111 = vmatpush1.xpose.msra.mxu0 0.0
    %112 = vmatprep.subr.mxu0 0.0
    %113 = vmatpush1.xpose.msra.mxu0 0.0
    %114 = vmatprep.subr.mxu0 0.0
    %115 = vmatpush1.xpose.msra.mxu0 0.0
    %116 = vmatprep.subr.mxu0 0.0
    %117 = vmatpush1.xpose.msra.mxu0 0.0
    %118 = vmatprep.subr.mxu0 0.0
    %119 = vmatpush1.xpose.msra.mxu0 0.0
    %120 = vmatprep.subr.mxu0 0.0
    %121 = vmatpush1.xpose.msra.mxu0 0.0
    %122 = vmatprep.subr.mxu0 0.0
    %123 = vmatpush1.xpose.msra.mxu0 0.0
    %124 = vmatprep.subr.mxu0 0.0
    %125 = vmatpush1.xpose.msra.mxu0 0.0
    %126 = vmatprep.subr.mxu0 0.0
    %127 = vmatpush1.xpose.msra.mxu0 0.0
    %128 = vmatprep.subr.mxu0 0.0
    %129 = vmatpush1.xpose.msra.mxu0 0.0
    %130 = vmatprep.subr.mxu0 0.0
    %131 = vmatpush1.xpose.msra.mxu0 0.0
    %132 = vmatprep.subr.mxu0 0.0
    %133 = vmatpush1.xpose.msra.mxu0 0.0
    %134 = vmatprep.subr.mxu0 0.0
    %135 = vmatpush1.xpose.msra.mxu0 0.0
    %136 = vmatprep.subr.mxu0 0.0
    %137 = vmatpush1.xpose.msra.mxu0 0.0
    %138 = vmatprep.subr.mxu0 0.0
    %139 = vmatpush1.xpose.msra.mxu0 0.0
    %140 = vmatprep.subr.mxu0 0.0
    %141 = vmatpush1.xpose.msra.mxu0 0.0
    %142 = vmatprep.mubr.f32.mxu0 0.0
    %143 = vmatmul.mubr.f32.gmra.mrb[0].mxu0 %v70
    %v144 = vpop.f32.mrb[0].mxu0
    %v145 = vadd.f32 %v59, %v144
    %v146 = vpop.f32.mrb[0].mxu0
    %147 = vdwg.mxu0
    %v149 = vsel %vm68, %v63, 0
    %v152 = vsel %vm68, %v66, 0
    %v155 = vsel %vm68, %v67, 0
    %157 = vmatprep.subr.mxu0 0.0
    %158 = vmatpush1.xpose.msra.mxu0 %v152
    %159 = vmatprep.subr.mxu0 0.0
    %160 = vmatpush1.xpose.msra.mxu0 %v155
    %161 = vmatprep.subr.mxu0 0.0
    %162 = vmatpush1.xpose.msra.mxu0 0.0
    %163 = vmatprep.subr.mxu0 0.0
    %164 = vmatpush1.xpose.msra.mxu0 0.0
    %165 = vmatprep.subr.mxu0 0.0
    %166 = vmatpush1.xpose.msra.mxu0 0.0
    %167 = vmatprep.subr.mxu0 0.0
    %168 = vmatpush1.xpose.msra.mxu0 0.0
    %169 = vmatprep.subr.mxu0 0.0
    %170 = vmatpush1.xpose.msra.mxu0 0.0
    %171 = vmatprep.subr.mxu0 0.0
    %172 = vmatpush1.xpose.msra.mxu0 0.0
    %173 = vmatprep.subr.mxu0 0.0
    %174 = vmatpush1.xpose.msra.mxu0 0.0
    %175 = vmatprep.subr.mxu0 0.0
    %176 = vmatpush1.xpose.msra.mxu0 0.0
    %177 = vmatprep.subr.mxu0 0.0
    %178 = vmatpush1.xpose.msra.mxu0 0.0
    %179 = vmatprep.subr.mxu0 0.0
    %180 = vmatpush1.xpose.msra.mxu0 0.0
    %181 = vmatprep.subr.mxu0 0.0
    %182 = vmatpush1.xpose.msra.mxu0 0.0
    %183 = vmatprep.subr.mxu0 0.0
    %184 = vmatpush1.xpose.msra.mxu0 0.0
    %185 = vmatprep.subr.mxu0 0.0
    %186 = vmatpush1.xpose.msra.mxu0 0.0
    %187 = vmatprep.subr.mxu0 0.0
    %188 = vmatpush1.xpose.msra.mxu0 0.0
    %189 = vmatprep.subr.mxu0 0.0
    %190 = vmatpush1.xpose.msra.mxu0 0.0
    %191 = vmatprep.subr.mxu0 0.0
    %192 = vmatpush1.xpose.msra.mxu0 0.0
    %193 = vmatprep.subr.mxu0 0.0
    %194 = vmatpush1.xpose.msra.mxu0 0.0
    %195 = vmatprep.subr.mxu0 0.0
    %196 = vmatpush1.xpose.msra.mxu0 0.0
    %197 = vmatprep.subr.mxu0 0.0
    %198 = vmatpush1.xpose.msra.mxu0 0.0
    %199 = vmatprep.subr.mxu0 0.0
    %200 = vmatpush1.xpose.msra.mxu0 0.0
    %201 = vmatprep.subr.mxu0 0.0
    %202 = vmatpush1.xpose.msra.mxu0 0.0
    %203 = vmatprep.subr.mxu0 0.0
    %204 = vmatpush1.xpose.msra.mxu0 0.0
    %205 = vmatprep.subr.mxu0 0.0
    %206 = vmatpush1.xpose.msra.mxu0 0.0
    %207 = vmatprep.subr.mxu0 0.0
    %208 = vmatpush1.xpose.msra.mxu0 0.0
    %209 = vmatprep.subr.mxu0 0.0
    %210 = vmatpush1.xpose.msra.mxu0 0.0
    %211 = vmatprep.subr.mxu0 0.0
    %212 = vmatpush1.xpose.msra.mxu0 0.0
    %213 = vmatprep.subr.mxu0 0.0
    %214 = vmatpush1.xpose.msra.mxu0 0.0
    %215 = vmatprep.subr.mxu0 0.0
    %216 = vmatpush1.xpose.msra.mxu0 0.0
    %217 = vmatprep.subr.mxu0 0.0
    %218 = vmatpush1.xpose.msra.mxu0 0.0
    %219 = vmatprep.subr.mxu0 0.0
    %220 = vmatpush1.xpose.msra.mxu0 0.0
    %221 = vmatprep.mubr.f32.mxu0 0.0
    %222 = vmatmul.mubr.f32.gmra.mrb[0].mxu0 %v149
    %v223 = vpop.f32.mrb[0].mxu0
    %v224 = vadd.f32 %v59, %v223
    %v225 = vpop.f32.mrb[0].mxu0
    %226 = vdwg.mxu0
    %vm227 = vcmask 130048
    %v228 = vsel %vm227, %v145, -inf
    %v229 = vrot.slane %v228, 4
    %v230 = vmax.f32 %v228, %v229
    %v231 = vrot.slane %v230, 2
    %v232 = vmax.f32 %v230, %v231
    %v233 = vrot.slane %v232, 1
    %v234 = vmax.f32 %v232, %v233
    %v235 = vsel %vm227, %v224, -inf
    %v236 = vrot.slane %v235, 4
    %v237 = vmax.f32 %v235, %v236
    %v238 = vrot.slane %v237, 2
    %v239 = vmax.f32 %v237, %v238
    %v240 = vrot.slane %v239, 1
    %v241 = vmax.f32 %v239, %v240
    %v242 = vsub.f32 %v145, %v234
    %v243 = vsub.f32 %v224, %v241
    %v244 = vmul.f32 %v242, 1.442695
    %v245 = vpow.pop %v244
    %v246 = vmul.f32 %v243, 1.442695
    %v247 = vpow.pop %v246
    %v248 = vsel %vm227, %v245, 0.0
    %v249 = vrot.slane %v248, 4
    %v250 = vadd.f32 %v248, %v249
    %v251 = vrot.slane %v250, 2
    %v252 = vadd.f32 %v250, %v251
    %v253 = vrot.slane %v252, 1
    %v254 = vadd.f32 %v252, %v253
    %v255 = vsel %vm227, %v247, 0.0
    %v256 = vrot.slane %v255, 4
    %v257 = vadd.f32 %v255, %v256
    %v258 = vrot.slane %v257, 2
    %v259 = vadd.f32 %v257, %v258
    %v260 = vrot.slane %v259, 1
    %v261 = vadd.f32 %v259, %v260
    %v262 = vrcp.pop %v254
    %v263 = vrcp.pop %v261
    %v264 = vmul.f32 %v245, %v262
    %v265 = vmul.f32 %v247, %v263
    %v266 = vld [vmem:[#allocation7] sm:$0xff]
    %v267 = vld [vmem:[#allocation7 + $0x8] sm:$0xff]
    %v268 = vld [vmem:[#allocation7 + $0x10] sm:$0xff]
    %v269 = vld [vmem:[#allocation7 + $0x18] sm:$0xff]
    %v271 = vsel %vm227, %v264, 0
    %273 = vmatprep.subr.mxu0 0.0
    %274 = vmatpush1.msra.mxu0 %v266
    %275 = vmatprep.subr.mxu0 0.0
    %276 = vmatpush1.msra.mxu0 %v267
    %277 = vmatprep.subr.mxu0 0.0
    %278 = vmatpush1.msra.mxu0 0.0
    %279 = vmatprep.subr.mxu0 0.0
    %280 = vmatpush1.msra.mxu0 0.0
    %281 = vmatprep.subr.mxu0 0.0
    %282 = vmatpush1.msra.mxu0 0.0
    %283 = vmatprep.subr.mxu0 0.0
    %284 = vmatpush1.msra.mxu0 0.0
    %285 = vmatprep.subr.mxu0 0.0
    %286 = vmatpush1.msra.mxu0 0.0
    %287 = vmatprep.subr.mxu0 0.0
    %288 = vmatpush1.msra.mxu0 0.0
    %289 = vmatprep.subr.mxu0 0.0
    %290 = vmatpush1.msra.mxu0 0.0
    %291 = vmatprep.subr.mxu0 0.0
    %292 = vmatpush1.msra.mxu0 0.0
    %293 = vmatprep.subr.mxu0 0.0
    %294 = vmatpush1.msra.mxu0 0.0
    %295 = vmatprep.subr.mxu0 0.0
    %296 = vmatpush1.msra.mxu0 0.0
    %297 = vmatprep.subr.mxu0 0.0
    %298 = vmatpush1.msra.mxu0 0.0
    %299 = vmatprep.subr.mxu0 0.0
    %300 = vmatpush1.msra.mxu0 0.0
    %301 = vmatprep.subr.mxu0 0.0
    %302 = vmatpush1.msra.mxu0 0.0
    %303 = vmatprep.subr.mxu0 0.0
    %304 = vmatpush1.msra.mxu0 0.0
    %305 = vmatprep.subr.mxu0 0.0
    %306 = vmatpush1.msra.mxu0 0.0
    %307 = vmatprep.subr.mxu0 0.0
    %308 = vmatpush1.msra.mxu0 0.0
    %309 = vmatprep.subr.mxu0 0.0
    %310 = vmatpush1.msra.mxu0 0.0
    %311 = vmatprep.subr.mxu0 0.0
    %312 = vmatpush1.msra.mxu0 0.0
    %313 = vmatprep.subr.mxu0 0.0
    %314 = vmatpush1.msra.mxu0 0.0
    %315 = vmatprep.subr.mxu0 0.0
    %316 = vmatpush1.msra.mxu0 0.0
    %317 = vmatprep.subr.mxu0 0.0
    %318 = vmatpush1.msra.mxu0 0.0
    %319 = vmatprep.subr.mxu0 0.0
    %320 = vmatpush1.msra.mxu0 0.0
    %321 = vmatprep.subr.mxu0 0.0
    %322 = vmatpush1.msra.mxu0 0.0
    %323 = vmatprep.subr.mxu0 0.0
    %324 = vmatpush1.msra.mxu0 0.0
    %325 = vmatprep.subr.mxu0 0.0
    %326 = vmatpush1.msra.mxu0 0.0
    %327 = vmatprep.subr.mxu0 0.0
    %328 = vmatpush1.msra.mxu0 0.0
    %329 = vmatprep.subr.mxu0 0.0
    %330 = vmatpush1.msra.mxu0 0.0
    %331 = vmatprep.subr.mxu0 0.0
    %332 = vmatpush1.msra.mxu0 0.0
    %333 = vmatprep.subr.mxu0 0.0
    %334 = vmatpush1.msra.mxu0 0.0
    %335 = vmatprep.subr.mxu0 0.0
    %336 = vmatpush1.msra.mxu0 0.0
    %337 = vmatprep.mubr.f32.mxu0 0.0
    %338 = vmatmul.mubr.f32.gmra.mrb[0].mxu0 %v271
    %v339 = vpop.f32.mrb[0].mxu0
    %v340 = vadd.f32 0.0, %v339
    %v341 = vpop.f32.mrb[0].mxu0
    %342 = vdwg.mxu0
    %v344 = vsel %vm227, %v265, 0
    %346 = vmatprep.subr.mxu0 0.0
    %347 = vmatpush1.msra.mxu0 %v268
    %348 = vmatprep.subr.mxu0 0.0
    %349 = vmatpush1.msra.mxu0 %v269
    %350 = vmatprep.subr.mxu0 0.0
    %351 = vmatpush1.msra.mxu0 0.0
    %352 = vmatprep.subr.mxu0 0.0
    %353 = vmatpush1.msra.mxu0 0.0
    %354 = vmatprep.subr.mxu0 0.0
    %355 = vmatpush1.msra.mxu0 0.0
    %356 = vmatprep.subr.mxu0 0.0
    %357 = vmatpush1.msra.mxu0 0.0
    %358 = vmatprep.subr.mxu0 0.0
    %359 = vmatpush1.msra.mxu0 0.0
    %360 = vmatprep.subr.mxu0 0.0
    %361 = vmatpush1.msra.mxu0 0.0
    %362 = vmatprep.subr.mxu0 0.0
    %363 = vmatpush1.msra.mxu0 0.0
    %364 = vmatprep.subr.mxu0 0.0
    %365 = vmatpush1.msra.mxu0 0.0
    %366 = vmatprep.subr.mxu0 0.0
    %367 = vmatpush1.msra.mxu0 0.0
    %368 = vmatprep.subr.mxu0 0.0
    %369 = vmatpush1.msra.mxu0 0.0
    %370 = vmatprep.subr.mxu0 0.0
    %371 = vmatpush1.msra.mxu0 0.0
    %372 = vmatprep.subr.mxu0 0.0
    %373 = vmatpush1.msra.mxu0 0.0
    %374 = vmatprep.subr.mxu0 0.0
    %375 = vmatpush1.msra.mxu0 0.0
    %376 = vmatprep.subr.mxu0 0.0
    %377 = vmatpush1.msra.mxu0 0.0
    %378 = vmatprep.subr.mxu0 0.0
    %379 = vmatpush1.msra.mxu0 0.0
    %380 = vmatprep.subr.mxu0 0.0
    %381 = vmatpush1.msra.mxu0 0.0
    %382 = vmatprep.subr.mxu0 0.0
    %383 = vmatpush1.msra.mxu0 0.0
    %384 = vmatprep.subr.mxu0 0.0
    %385 = vmatpush1.msra.mxu0 0.0
    %386 = vmatprep.subr.mxu0 0.0
    %387 = vmatpush1.msra.mxu0 0.0
    %388 = vmatprep.subr.mxu0 0.0
    %389 = vmatpush1.msra.mxu0 0.0
    %390 = vmatprep.subr.mxu0 0.0
    %391 = vmatpush1.msra.mxu0 0.0
    %392 = vmatprep.subr.mxu0 0.0
    %393 = vmatpush1.msra.mxu0 0.0
    %394 = vmatprep.subr.mxu0 0.0
    %395 = vmatpush1.msra.mxu0 0.0
    %396 = vmatprep.subr.mxu0 0.0
    %397 = vmatpush1.msra.mxu0 0.0
    %398 = vmatprep.subr.mxu0 0.0
    %399 = vmatpush1.msra.mxu0 0.0
    %400 = vmatprep.subr.mxu0 0.0
    %401 = vmatpush1.msra.mxu0 0.0
    %402 = vmatprep.subr.mxu0 0.0
    %403 = vmatpush1.msra.mxu0 0.0
    %404 = vmatprep.subr.mxu0 0.0
    %405 = vmatpush1.msra.mxu0 0.0
    %406 = vmatprep.subr.mxu0 0.0
    %407 = vmatpush1.msra.mxu0 0.0
    %408 = vmatprep.subr.mxu0 0.0
    %409 = vmatpush1.msra.mxu0 0.0
    %410 = vmatprep.mubr.f32.mxu0 0.0
    %411 = vmatmul.mubr.f32.gmra.mrb[0].mxu0 %v344
    %v412 = vpop.f32.mrb[0].mxu0
    %v413 = vadd.f32 0.0, %v412
    %v414 = vpop.f32.mrb[0].mxu0
    %415 = vdwg.mxu0
    %416 = vst.msk [vmem:[#allocation8] sm:$0xff] %vm227, %v340
    %417 = vst.msk [vmem:[#allocation8 + $0x8] sm:$0xff] %vm227, %v413
    // Predicated region
    $region30: #{attention_forward.1} parent=1 // pred_check
      _
    $region31: #{attention_forward.1} parent=1 // pred_check_branch
      %419 = sbr.rel (0) target = $region33
    $region32: #{attention_forward.1} parent=1 // pred_region
      %s421 = ssub.s32 256, 256
      %422 = vsyncadd [#allocation4], %s421
      %s423 = sshll.u32 [#allocation8], 4
      %s424 = int_to_ptr.vmem [resolvable:$true] %s423
      %429 = dma.vmem_to_hbm [thread:$0]  %s424, 256, %s4, [#allocation4], 128, 128, 8
    $region33: #{attention_forward.1} parent=1 // pred_fallthru
      _
    // Predicated region
    $region34: #{attention_forward.1} parent=1 // pred_check
      _
    $region35: #{attention_forward.1} parent=1 // pred_check_branch
      %431 = sbr.rel (0) target = $region37
    $region36: #{attention_forward.1} parent=1 // pred_region
      %432 = dma.done [#allocation4], 256
    $region37: #{attention_forward.1} parent=1 // pred_fallthru
      _
    %433 = vsyncpa [#allocation3], 1
    %434 = vsyncpa [#allocation6], 1
    %435 = vsyncpa [#allocation4], 1

</llo_original>
